<compile_context>
chip_gen: v7x
topology: tpu7x:2x2x1
jax: 0.10.0
libtpu: 0.0.40
codegen_flags: <defaults>
</compile_context>

<pallas_src>
import functools

import jax
import jax.numpy as jnp
from jax import lax
from jax.experimental import pallas as pl
from jax.experimental.pallas import tpu as pltpu


def _round_up(x, m):
    return ((x + m - 1) // m) * m


def _vmem_capacity_bytes():
    """Physical VMEM of the current TPU generation (fallback: 128 MiB)."""
    try:
        cap = int(pltpu.get_tpu_info().vmem_capacity_bytes)
        if cap > 0:
            return cap
    except Exception:
        pass
    return 128 * 1024 * 1024


def _s2d_full_kernel(x_ref, o_ref, *, r, ct, oht, unroll):
    """Full unfold in-kernel (lane-dense output path, OW >= 128).

    x_ref: (Ct, OHt*r, W) input tile; o_ref: (Ct*r*r, OHt, OW) output tile.
    """
    rr = r * r

    def per_channel(c, carry):
        for ki in range(r):
            # Sublane(H)-strided load straight from the Ref: rows ki, ki+r, ...
            rows = x_ref[c, pl.ds(ki, oht, stride=r), :]            # (OHt, W)
            for kj in range(r):
                # Lane split + direct store into the unfold channel slot:
                #   local out channel = c * r*r + ki * r + kj
                # (On v7x, if a trace shows this flipping to shuffle-bound, a
                #  single fused deinterleave per `rows` is the next step.)
                o_ref[c * rr + ki * r + kj, :, :] = rows[:, kj::r]  # (OHt, OW)
        return carry

    lax.fori_loop(0, ct, per_channel, 0, unroll=unroll)


def _s2d_rows_kernel(x_ref, o_ref, *, r, ct, oht, unroll):
    """Narrow-output path (OW < 128): sublane (ki) deinterleave only.

    Stores full-width, lane-dense row slabs; no in-kernel lane shuffles.
    x_ref: (Ct, OHt*r, W); o_ref: (Ct*r, OHt, W) with
      o[c*r + ki, oh, :] = x[c, oh*r + ki, :].
    """

    def per_channel(c, carry):
        for ki in range(r):
            o_ref[c * r + ki, :, :] = x_ref[c, pl.ds(ki, oht, stride=r), :]
        return carry

    lax.fori_loop(0, ct, per_channel, 0, unroll=unroll)


def _tile_footprint(ct, oht, *, r, W, OW, itemsize, full_unfold):
    """(padded input-tile bytes, padded output-tile bytes) for one grid step."""
    in_b = ct * _round_up(oht * r, 8) * _round_up(W, 128) * itemsize
    if full_unfold:
        out_b = ct * r * r * _round_up(oht, 8) * _round_up(OW, 128) * itemsize
    else:
        out_b = ct * r * _round_up(oht, 8) * _round_up(W, 128) * itemsize
    return in_b, out_b


def _choose_tiles(C, OH, *, r, W, OW, itemsize, full_unfold, target_bytes):
    """Largest (Ct, OHt) whose combined padded in+out tile stays under
    target_bytes.  Grows OHt before Ct (store-slot friendly), keeps blocks
    (8,128)-legal, and falls back to the smallest legal tile if nothing fits
    (the VMEM limit is derived from whatever is chosen)."""
    oht_cands = sorted({OH} | {d for d in range(8, OH, 8) if OH % d == 0})
    ct_cands = sorted(d for d in range(1, C + 1) if C % d == 0)

    def combined(ct, oht):
        return sum(_tile_footprint(ct, oht, r=r, W=W, OW=OW,
                                   itemsize=itemsize, full_unfold=full_unfold))

    oht = oht_cands[0]
    for cand in oht_cands:                      # grow OHt first
        if combined(ct_cands[0], cand) <= target_bytes:
            oht = cand
    ct = ct_cands[0]
    for cand in ct_cands:                       # then Ct
        if combined(cand, oht) <= target_bytes:
            ct = cand
    return ct, oht


def space2depth(x, down_factor, *, input_buffers=2):
    """Pallas TPU Space2Depth. x: (N, C, H, W) -> (N, C*r*r, H//r, W//r)."""
    r = int(down_factor)
    N, C, H, W = x.shape
    assert H % r == 0 and W % r == 0, "H and W must be divisible by down_factor"
    if r == 1:
        return x
    OH, OW = H // r, W // r
    itemsize = jnp.dtype(x.dtype).itemsize

    vmem_cap = _vmem_capacity_bytes()
    # Combined (in + out) tile budget per grid step: ~12 MiB on 128 MiB parts
    # (v5e/v6e), ~5 MiB on 64 MiB parts (v7x).
    target_bytes = (12 << 20) if vmem_cap >= (96 << 20) else (5 << 20)

    # Production path: OW >= 128 keeps the output lane-dense, so the kernel
    # writes the unfold channels directly.  Narrow outputs (OW < 128) would
    # force masked partial stores, so they use the row-slab fallback below.
    full_unfold = OW >= 128

    ct, oht = _choose_tiles(C, OH, r=r, W=W, OW=OW, itemsize=itemsize,
                            full_unfold=full_unfold, target_bytes=target_bytes)
    in_tile, out_tile = _tile_footprint(ct, oht, r=r, W=W, OW=OW,
                                        itemsize=itemsize,
                                        full_unfold=full_unfold)

    # Real working set: `input_buffers` input tiles + double-buffered output
    # tile, plus headroom for compiler scratch.  Never declare beyond physical.
    vmem_limit = input_buffers * in_tile + 2 * out_tile + (2 << 20)
    vmem_limit = int(min(max(vmem_limit, 8 << 20), vmem_cap))

    # Full unroll for small channel tiles; integer partial unroll otherwise.
    unroll = True if ct <= 8 else 4

    in_spec_kwargs = {}
    if input_buffers != 2:
        # e.g. pl.Buffered(3) on v7x when the trace shows exposed DMA.
        in_spec_kwargs["pipeline_mode"] = pl.Buffered(input_buffers)
    in_spec = pl.BlockSpec((None, ct, oht * r, W),
                           lambda n, cb, hb: (n, cb, hb, 0), **in_spec_kwargs)

    grid = (N, C // ct, OH // oht)
    compiler_params = pltpu.CompilerParams(
        dimension_semantics=("parallel", "parallel", "parallel"),
        vmem_limit_bytes=vmem_limit)
    cost = pl.CostEstimate(flops=0, transcendentals=0,
                           bytes_accessed=2 * x.size * itemsize)

    if full_unfold:
        kernel = functools.partial(_s2d_full_kernel, r=r, ct=ct, oht=oht,
                                   unroll=unroll)
        return pl.pallas_call(
            kernel,
            out_shape=jax.ShapeDtypeStruct((N, C * r * r, OH, OW), x.dtype),
            grid_spec=pltpu.PrefetchScalarGridSpec(
                num_scalar_prefetch=0,
                grid=grid,
                in_specs=[in_spec],
                out_specs=pl.BlockSpec((None, ct * r * r, oht, OW),
                                       lambda n, cb, hb: (n, cb, hb, 0)),
            ),
            compiler_params=compiler_params,
            cost_estimate=cost,
        )(x)

    # Narrow-output fallback: kernel emits (N, C*r, OH, W) with
    #   mid[n, c*r + ki, oh, :] = x[n, c, oh*r + ki, :]
    # using only strided sublane loads and full-width lane-dense stores; the
    # remaining kj deinterleave is a tiny XLA reshape/transpose in the wrapper.
    kernel = functools.partial(_s2d_rows_kernel, r=r, ct=ct, oht=oht,
                               unroll=unroll)
    mid = pl.pallas_call(
        kernel,
        out_shape=jax.ShapeDtypeStruct((N, C * r, OH, W), x.dtype),
        grid_spec=pltpu.PrefetchScalarGridSpec(
            num_scalar_prefetch=0,
            grid=grid,
            in_specs=[in_spec],
            out_specs=pl.BlockSpec((None, ct * r, oht, W),
                                   lambda n, cb, hb: (n, cb, hb, 0)),
        ),
        compiler_params=compiler_params,
        cost_estimate=cost,
    )(x)
    mid = mid.reshape(N, C, r, OH, OW, r)
    out = jnp.transpose(mid, (0, 1, 2, 5, 3, 4))
    return out.reshape(N, C * r * r, OH, OW)


def _space2depth_ref(x, r):
    # Pure-JAX reference matching torch.nn.functional.unfold semantics.
    n, c, h, w = x.shape
    oh, ow = h // r, w // r
    y = x.reshape(n, c, oh, r, ow, r)
    y = jnp.transpose(y, (0, 1, 3, 5, 2, 4))  # (n, c, r, r, oh, ow)
    return y.reshape(n, c * r * r, oh, ow)


if __name__ == "__main__":
    key = jax.random.PRNGKey(0)
    k1, k2, k3 = jax.random.split(key, 3)

    # Case 1: canonical small shape (narrow output -> lane-dense fallback path).
    x1 = jax.random.normal(k1, (2, 4, 16, 16), dtype=jnp.float32)
    out1 = jax.block_until_ready(space2depth(x1, 2))
    ref1 = _space2depth_ref(x1, 2)
    assert out1.shape == (2, 16, 8, 8) and out1.dtype == x1.dtype, out1.shape
    assert jnp.array_equal(out1, ref1), "Pallas Space2Depth mismatch (r=2, OW=8)"

    # Case 2: different r / channel count (exercises the in-kernel channel loop).
    x2 = jax.random.normal(k2, (1, 3, 32, 32), dtype=jnp.float32)
    out2 = jax.block_until_ready(space2depth(x2, 4))
    ref2 = _space2depth_ref(x2, 4)
    assert out2.shape == (1, 48, 8, 8) and out2.dtype == x2.dtype, out2.shape
    assert jnp.array_equal(out2, ref2), "Pallas Space2Depth mismatch (r=4, OW=8)"

    # Case 3: lane-dense production-style width (OW multiple of 128) so the
    # direct full-unfold kernel path is exercised on-device as well.
    x3 = jax.random.normal(k3, (1, 2, 16, 256), dtype=jnp.float32)
    out3 = jax.block_until_ready(space2depth(x3, 2))
    ref3 = _space2depth_ref(x3, 2)
    assert out3.shape == (1, 8, 8, 128) and out3.dtype == x3.dtype, out3.shape
    assert jnp.array_equal(out3, ref3), "Pallas Space2Depth mismatch (r=2, OW=128)"

    print("KERNEL_OK")
</pallas_src>

<mosaic_0001>
module attributes {stable_mosaic.version = 11 : i64} {
  func.func @_s2d_rows_kernel(%arg0: i32, %arg1: i32, %arg2: i32, %arg3: memref<1x4x16x16xf32, #tpu.memory_space<vmem>>, %arg4: memref<1x8x8x16xf32, #tpu.memory_space<vmem>>) attributes {dimension_semantics = [#tpu.dimension_semantics<parallel>, #tpu.dimension_semantics<parallel>, #tpu.dimension_semantics<parallel>], iteration_bounds = array<i64: 2, 1, 1>, scalar_prefetch = 0 : i64, scratch_operands = 0 : i64, tpu.core_type = #tpu.core_type<tc>, window_params = [{transform_indices = @transform_0, window_bounds = array<i64: 1, 4, 16, 16>}, {transform_indices = @transform_1, window_bounds = array<i64: 1, 8, 8, 16>}]} {
    %c0_i32 = arith.constant 0 : i32
    %c0 = arith.constant 0 : index
    %0 = arith.index_cast %c0_i32 : i32 to index
    %c0_0 = arith.constant 0 : index
    %c0_1 = arith.constant 0 : index
    %1 = tpu.strided_load %arg3[%c0, %0, %c0_0, %c0_1] {strides = array<i32: 1, 1, 2, 1>} : memref<1x4x16x16xf32, #tpu.memory_space<vmem>>, vector<1x1x8x16xf32>
    %2 = vector.shape_cast %1 : vector<1x1x8x16xf32> to vector<8x16xf32>
    %c2_i32 = arith.constant 2 : i32
    %3 = arith.muli %c0_i32, %c2_i32 : i32
    %c0_i32_2 = arith.constant 0 : i32
    %4 = arith.addi %3, %c0_i32_2 : i32
    %c0_3 = arith.constant 0 : index
    %5 = arith.index_cast %4 : i32 to index
    %c0_4 = arith.constant 0 : index
    %c0_5 = arith.constant 0 : index
    %6 = vector.load %arg4[%c0_3, %5, %c0_4, %c0_5] : memref<1x8x8x16xf32, #tpu.memory_space<vmem>>, vector<1x1x8x16xf32>
    %7 = vector.shape_cast %6 : vector<1x1x8x16xf32> to vector<8x16xf32>
    %8 = vector.shape_cast %2 : vector<8x16xf32> to vector<1x1x8x16xf32>
    tpu.vector_store %arg4[%c0_3, %5, %c0_4, %c0_5], %8 {strides = array<i32>} : memref<1x8x8x16xf32, #tpu.memory_space<vmem>>, vector<1x1x8x16xf32>,
    %c0_6 = arith.constant 0 : index
    %9 = arith.index_cast %c0_i32 : i32 to index
    %c1 = arith.constant 1 : index
    %c0_7 = arith.constant 0 : index
    %10 = tpu.strided_load %arg3[%c0_6, %9, %c1, %c0_7] {strides = array<i32: 1, 1, 2, 1>} : memref<1x4x16x16xf32, #tpu.memory_space<vmem>>, vector<1x1x8x16xf32>
    %11 = vector.shape_cast %10 : vector<1x1x8x16xf32> to vector<8x16xf32>
    %c2_i32_8 = arith.constant 2 : i32
    %12 = arith.muli %c0_i32, %c2_i32_8 : i32
    %c1_i32 = arith.constant 1 : i32
    %13 = arith.addi %12, %c1_i32 : i32
    %c0_9 = arith.constant 0 : index
    %14 = arith.index_cast %13 : i32 to index
    %c0_10 = arith.constant 0 : index
    %c0_11 = arith.constant 0 : index
    %15 = vector.load %arg4[%c0_9, %14, %c0_10, %c0_11] : memref<1x8x8x16xf32, #tpu.memory_space<vmem>>, vector<1x1x8x16xf32>
    %16 = vector.shape_cast %15 : vector<1x1x8x16xf32> to vector<8x16xf32>
    %17 = vector.shape_cast %11 : vector<8x16xf32> to vector<1x1x8x16xf32>
    tpu.vector_store %arg4[%c0_9, %14, %c0_10, %c0_11], %17 {strides = array<i32>} : memref<1x8x8x16xf32, #tpu.memory_space<vmem>>, vector<1x1x8x16xf32>,
    %c1_i32_12 = arith.constant 1 : i32
    %c0_13 = arith.constant 0 : index
    %18 = arith.index_cast %c1_i32_12 : i32 to index
    %c0_14 = arith.constant 0 : index
    %c0_15 = arith.constant 0 : index
    %19 = tpu.strided_load %arg3[%c0_13, %18, %c0_14, %c0_15] {strides = array<i32: 1, 1, 2, 1>} : memref<1x4x16x16xf32, #tpu.memory_space<vmem>>, vector<1x1x8x16xf32>
    %20 = vector.shape_cast %19 : vector<1x1x8x16xf32> to vector<8x16xf32>
    %c2_i32_16 = arith.constant 2 : i32
    %21 = arith.muli %c1_i32_12, %c2_i32_16 : i32
    %c0_i32_17 = arith.constant 0 : i32
    %22 = arith.addi %21, %c0_i32_17 : i32
    %c0_18 = arith.constant 0 : index
    %23 = arith.index_cast %22 : i32 to index
    %c0_19 = arith.constant 0 : index
    %c0_20 = arith.constant 0 : index
    %24 = vector.load %arg4[%c0_18, %23, %c0_19, %c0_20] : memref<1x8x8x16xf32, #tpu.memory_space<vmem>>, vector<1x1x8x16xf32>
    %25 = vector.shape_cast %24 : vector<1x1x8x16xf32> to vector<8x16xf32>
    %26 = vector.shape_cast %20 : vector<8x16xf32> to vector<1x1x8x16xf32>
    tpu.vector_store %arg4[%c0_18, %23, %c0_19, %c0_20], %26 {strides = array<i32>} : memref<1x8x8x16xf32, #tpu.memory_space<vmem>>, vector<1x1x8x16xf32>,
    %c0_21 = arith.constant 0 : index
    %27 = arith.index_cast %c1_i32_12 : i32 to index
    %c1_22 = arith.constant 1 : index
    %c0_23 = arith.constant 0 : index
    %28 = tpu.strided_load %arg3[%c0_21, %27, %c1_22, %c0_23] {strides = array<i32: 1, 1, 2, 1>} : memref<1x4x16x16xf32, #tpu.memory_space<vmem>>, vector<1x1x8x16xf32>
    %29 = vector.shape_cast %28 : vector<1x1x8x16xf32> to vector<8x16xf32>
    %c2_i32_24 = arith.constant 2 : i32
    %30 = arith.muli %c1_i32_12, %c2_i32_24 : i32
    %c1_i32_25 = arith.constant 1 : i32
    %31 = arith.addi %30, %c1_i32_25 : i32
    %c0_26 = arith.constant 0 : index
    %32 = arith.index_cast %31 : i32 to index
    %c0_27 = arith.constant 0 : index
    %c0_28 = arith.constant 0 : index
    %33 = vector.load %arg4[%c0_26, %32, %c0_27, %c0_28] : memref<1x8x8x16xf32, #tpu.memory_space<vmem>>, vector<1x1x8x16xf32>
    %34 = vector.shape_cast %33 : vector<1x1x8x16xf32> to vector<8x16xf32>
    %35 = vector.shape_cast %29 : vector<8x16xf32> to vector<1x1x8x16xf32>
    tpu.vector_store %arg4[%c0_26, %32, %c0_27, %c0_28], %35 {strides = array<i32>} : memref<1x8x8x16xf32, #tpu.memory_space<vmem>>, vector<1x1x8x16xf32>,
    %c2_i32_29 = arith.constant 2 : i32
    %c0_30 = arith.constant 0 : index
    %36 = arith.index_cast %c2_i32_29 : i32 to index
    %c0_31 = arith.constant 0 : index
    %c0_32 = arith.constant 0 : index
    %37 = tpu.strided_load %arg3[%c0_30, %36, %c0_31, %c0_32] {strides = array<i32: 1, 1, 2, 1>} : memref<1x4x16x16xf32, #tpu.memory_space<vmem>>, vector<1x1x8x16xf32>
    %38 = vector.shape_cast %37 : vector<1x1x8x16xf32> to vector<8x16xf32>
    %c2_i32_33 = arith.constant 2 : i32
    %39 = arith.muli %c2_i32_29, %c2_i32_33 : i32
    %c0_i32_34 = arith.constant 0 : i32
    %40 = arith.addi %39, %c0_i32_34 : i32
    %c0_35 = arith.constant 0 : index
    %41 = arith.index_cast %40 : i32 to index
    %c0_36 = arith.constant 0 : index
    %c0_37 = arith.constant 0 : index
    %42 = vector.load %arg4[%c0_35, %41, %c0_36, %c0_37] : memref<1x8x8x16xf32, #tpu.memory_space<vmem>>, vector<1x1x8x16xf32>
    %43 = vector.shape_cast %42 : vector<1x1x8x16xf32> to vector<8x16xf32>
    %44 = vector.shape_cast %38 : vector<8x16xf32> to vector<1x1x8x16xf32>
    tpu.vector_store %arg4[%c0_35, %41, %c0_36, %c0_37], %44 {strides = array<i32>} : memref<1x8x8x16xf32, #tpu.memory_space<vmem>>, vector<1x1x8x16xf32>,
    %c0_38 = arith.constant 0 : index
    %45 = arith.index_cast %c2_i32_29 : i32 to index
    %c1_39 = arith.constant 1 : index
    %c0_40 = arith.constant 0 : index
    %46 = tpu.strided_load %arg3[%c0_38, %45, %c1_39, %c0_40] {strides = array<i32: 1, 1, 2, 1>} : memref<1x4x16x16xf32, #tpu.memory_space<vmem>>, vector<1x1x8x16xf32>
    %47 = vector.shape_cast %46 : vector<1x1x8x16xf32> to vector<8x16xf32>
    %c2_i32_41 = arith.constant 2 : i32
    %48 = arith.muli %c2_i32_29, %c2_i32_41 : i32
    %c1_i32_42 = arith.constant 1 : i32
    %49 = arith.addi %48, %c1_i32_42 : i32
    %c0_43 = arith.constant 0 : index
    %50 = arith.index_cast %49 : i32 to index
    %c0_44 = arith.constant 0 : index
    %c0_45 = arith.constant 0 : index
    %51 = vector.load %arg4[%c0_43, %50, %c0_44, %c0_45] : memref<1x8x8x16xf32, #tpu.memory_space<vmem>>, vector<1x1x8x16xf32>
    %52 = vector.shape_cast %51 : vector<1x1x8x16xf32> to vector<8x16xf32>
    %53 = vector.shape_cast %47 : vector<8x16xf32> to vector<1x1x8x16xf32>
    tpu.vector_store %arg4[%c0_43, %50, %c0_44, %c0_45], %53 {strides = array<i32>} : memref<1x8x8x16xf32, #tpu.memory_space<vmem>>, vector<1x1x8x16xf32>,
    %c3_i32 = arith.constant 3 : i32
    %c0_46 = arith.constant 0 : index
    %54 = arith.index_cast %c3_i32 : i32 to index
    %c0_47 = arith.constant 0 : index
    %c0_48 = arith.constant 0 : index
    %55 = tpu.strided_load %arg3[%c0_46, %54, %c0_47, %c0_48] {strides = array<i32: 1, 1, 2, 1>} : memref<1x4x16x16xf32, #tpu.memory_space<vmem>>, vector<1x1x8x16xf32>
    %56 = vector.shape_cast %55 : vector<1x1x8x16xf32> to vector<8x16xf32>
    %c2_i32_49 = arith.constant 2 : i32
    %57 = arith.muli %c3_i32, %c2_i32_49 : i32
    %c0_i32_50 = arith.constant 0 : i32
    %58 = arith.addi %57, %c0_i32_50 : i32
    %c0_51 = arith.constant 0 : index
    %59 = arith.index_cast %58 : i32 to index
    %c0_52 = arith.constant 0 : index
    %c0_53 = arith.constant 0 : index
    %60 = vector.load %arg4[%c0_51, %59, %c0_52, %c0_53] : memref<1x8x8x16xf32, #tpu.memory_space<vmem>>, vector<1x1x8x16xf32>
    %61 = vector.shape_cast %60 : vector<1x1x8x16xf32> to vector<8x16xf32>
    %62 = vector.shape_cast %56 : vector<8x16xf32> to vector<1x1x8x16xf32>
    tpu.vector_store %arg4[%c0_51, %59, %c0_52, %c0_53], %62 {strides = array<i32>} : memref<1x8x8x16xf32, #tpu.memory_space<vmem>>, vector<1x1x8x16xf32>,
    %c0_54 = arith.constant 0 : index
    %63 = arith.index_cast %c3_i32 : i32 to index
    %c1_55 = arith.constant 1 : index
    %c0_56 = arith.constant 0 : index
    %64 = tpu.strided_load %arg3[%c0_54, %63, %c1_55, %c0_56] {strides = array<i32: 1, 1, 2, 1>} : memref<1x4x16x16xf32, #tpu.memory_space<vmem>>, vector<1x1x8x16xf32>
    %65 = vector.shape_cast %64 : vector<1x1x8x16xf32> to vector<8x16xf32>
    %c2_i32_57 = arith.constant 2 : i32
    %66 = arith.muli %c3_i32, %c2_i32_57 : i32
    %c1_i32_58 = arith.constant 1 : i32
    %67 = arith.addi %66, %c1_i32_58 : i32
    %c0_59 = arith.constant 0 : index
    %68 = arith.index_cast %67 : i32 to index
    %c0_60 = arith.constant 0 : index
    %c0_61 = arith.constant 0 : index
    %69 = vector.load %arg4[%c0_59, %68, %c0_60, %c0_61] : memref<1x8x8x16xf32, #tpu.memory_space<vmem>>, vector<1x1x8x16xf32>
    %70 = vector.shape_cast %69 : vector<1x1x8x16xf32> to vector<8x16xf32>
    %71 = vector.shape_cast %65 : vector<8x16xf32> to vector<1x1x8x16xf32>
    tpu.vector_store %arg4[%c0_59, %68, %c0_60, %c0_61], %71 {strides = array<i32>} : memref<1x8x8x16xf32, #tpu.memory_space<vmem>>, vector<1x1x8x16xf32>,
    %c4_i32 = arith.constant 4 : i32
    return
  }
  func.func @transform_0(%arg0: i32, %arg1: i32, %arg2: i32) -> (i32, i32, i32, i32) {
    %c0_i32 = arith.constant 0 : i32
    %c0_i32_0 = arith.constant 0 : i32
    return %arg0, %arg1, %arg2, %c0_i32 : i32, i32, i32, i32
  }
  func.func @transform_1(%arg0: i32, %arg1: i32, %arg2: i32) -> (i32, i32, i32, i32) {
    %c0_i32 = arith.constant 0 : i32
    %c0_i32_0 = arith.constant 0 : i32
    return %arg0, %arg1, %arg2, %c0_i32 : i32, i32, i32, i32
  }
}

</mosaic_0001>

<llo_original>
// kernel: tpu_custom_call.1
$region0: #{tpu_custom_call.1}
  #allocation0 [shape = 'u32[]', space=smem, size = 0x4, offset = 0x4, fixed_abs, tag = 'smem constant byte address 0x4 - core index']
  #allocation1 [shape = 'u32[144,128]{1,0:T(1,128)}', space=vmem, size = 0x12000, scoped, tag = 'internal scratch']
  %s0 = inlined_call_operand.hbm [shape: f32[2,4,16,16], index: 0, kind: input, shape index: {}]
  %s1 = inlined_call_operand.hbm [shape: f32[2,8,8,16], index: 1, kind: output, shape index: {}]
  %s2 = sld [smem:[#allocation0]]
  $region41: #{tpu_custom_call.1} parent=0
    _
  %s4 = ssub.s32 1, %s2
  %s5 = scalar_select 0, %s4, %s2
  $region1: #{tpu_custom_call.1} parent=0
    #allocation2 [shape = 'u8[65536]{0}', space=vmem, size = 0x10000, scoped, tag = 'input window, operand 0']
    #allocation3 [shape = 's32[2]{0}', space=sflag, size = 0x8, scoped, tag = 'scoped memory for tpu_custom_call.1']
    #allocation4 [shape = 's32[2]{0}', space=sflag, size = 0x8, scoped, tag = 'scoped memory for tpu_custom_call.1']
    #allocation5 [shape = 'u8[65536]{0}', space=vmem, size = 0x10000, scoped, tag = 'output window, operand 0']
    %6 = vsyncpa [#allocation3], 0
    %s7 = scalar_lea.sflag [#allocation3], 1
    %8 = vsyncpa %s7, 0
    %9 = vsyncpa [#allocation4], 0
    %s10 = scalar_lea.sflag [#allocation4], 1
    %11 = vsyncpa %s10, 0
    loop: start=0, step=1, limit=4
    $region2: #{tpu_custom_call.1} parent=1 // loop_pre_header
      _
    $region3: #{tpu_custom_call.1} parent=1 // loop_header
      %s13 = sphi 0, %s17
      %p14 = scmp.ge.s32.totalorder %s13, 4
      %s20 = sphi 0, %s39
      %s21 = sphi 0, %s35
      %s22 = sphi 0, %s31
      %s23 = sphi 0, %s20
      %s24 = sphi 0, %s21
      %s25 = sphi 0, %s22
      %s26 = sphi 0, %s23
      %s27 = sphi 0, %s24
      %s28 = sphi 0, %s25
      %s46 = sphi 0, %s48
      %s49 = sphi 0, %s46
      %s50 = sphi 0, %s49
      %s66 = sphi 0, %s50
      %s76 = sphi 0, %s78
      %s79 = sphi 0, %s76
      %s80 = sphi 0, %s79
      %s96 = sphi 0, %s80
    $region4: #{tpu_custom_call.1} parent=1 // loop_header_branch
      %16 = sbr.rel (%p14) target = $region8
    $region5: #{tpu_custom_call.1} parent=1 // loop_body
      %s18 = ssub.s32 %s13, 1
      %s19 = ssub.s32 %s13, 2
      %s29 = sadd.s32 1, %s22
      %p30 = scmp.ge.s32.totalorder %s29, 1
      %s31 = scalar_select %p30, 0, %s29
      %s32 = sadd.s32 1, %s21
      %s33 = scalar_select %p30, %s32, %s21
      %p34 = scmp.ge.s32.totalorder %s33, 1
      %s35 = scalar_select %p34, 0, %s33
      %s36 = sadd.s32 1, %s20
      %s37 = scalar_select %p34, %s36, %s20
      %p38 = scmp.ge.s32.totalorder %s37, 2
      %s39 = scalar_select %p38, 0, %s37
      %s40 = ssub.s32 %s20, %s39
      %s41 = ssub.s32 %s21, %s35
      %s42 = sor.u32 %s40, %s41
      %s43 = ssub.s32 %s22, %s31
      %s44 = sor.u32 %s42, %s43
      %p45 = scmp.eq.s32.totalorder %s44, 0
      %s47 = sadd.s32 %s46, 1
      %s48 = scalar_select %p45, %s46, %s47
      %p51 = pneg %p45
      %p52 = scmp.eq.s32.totalorder %s13, 1
      %p53 = por %p51, %p52
      %p54 = scmp.ne.s32.totalorder %s46, %s49
      %p55 = scmp.eq.s32.totalorder %s13, 0
      %p56 = por %p54, %p55
      %p57 = scmp.ne.s32.totalorder %s46, %s49
      %p58 = scmp.eq.s32.totalorder %s18, 1
      %p59 = por %p57, %p58
      %p60 = scmp.ne.s32.totalorder %s49, %s50
      %p61 = scmp.eq.s32.totalorder %s18, 0
      %p62 = por %p60, %p61
      %p63 = scmp.ne.s32.totalorder %s49, %s50
      %p64 = scmp.eq.s32.totalorder %s19, 1
      %p65 = por %p63, %p64
      %p67 = scmp.ne.s32.totalorder %s50, %s66
      %p68 = scmp.eq.s32.totalorder %s19, 0
      %p69 = por %p67, %p68
      %s70 = ssub.s32 %s20, %s39
      %s71 = ssub.s32 %s21, %s35
      %s72 = sor.u32 %s70, %s71
      %s73 = ssub.s32 %s22, %s31
      %s74 = sor.u32 %s72, %s73
      %p75 = scmp.eq.s32.totalorder %s74, 0
      %s77 = sadd.s32 %s76, 1
      %s78 = scalar_select %p75, %s76, %s77
      %p81 = pneg %p75
      %p82 = scmp.eq.s32.totalorder %s13, 1
      %p83 = por %p81, %p82
      %p84 = scmp.ne.s32.totalorder %s76, %s79
      %p85 = scmp.eq.s32.totalorder %s13, 0
      %p86 = por %p84, %p85
      %p87 = scmp.ne.s32.totalorder %s76, %s79
      %p88 = scmp.eq.s32.totalorder %s18, 1
      %p89 = por %p87, %p88
      %p90 = scmp.ne.s32.totalorder %s79, %s80
      %p91 = scmp.eq.s32.totalorder %s18, 0
      %p92 = por %p90, %p91
      %p93 = scmp.ne.s32.totalorder %s79, %s80
      %p94 = scmp.eq.s32.totalorder %s19, 1
      %p95 = por %p93, %p94
      %p97 = scmp.ne.s32.totalorder %s80, %s96
      %p98 = scmp.eq.s32.totalorder %s19, 0
      %p99 = por %p97, %p98
      %p100 = scmp.le.s32.totalorder 1, %s13
      %p101 = scmp.lt.s32.totalorder %s13, 3
      %p102 = pnand %p100, %p101
      %p103 = pneg %p102
      // Predicated region
      $region9: #{tpu_custom_call.1} parent=5 // pred_check
        _
      $region10: #{tpu_custom_call.1} parent=5 // pred_check_branch
        %105 = sbr.rel (%p102) target = $region12
      $region11: #{tpu_custom_call.1} parent=5 // pred_region
        %s106 = ssub.s32 %s13, 1
      $region12: #{tpu_custom_call.1} parent=5 // pred_fallthru
        _
      %p107 = scmp.lt.s32.totalorder %s13, 2
      // Predicated region
      $region13: #{tpu_custom_call.1} parent=5 // pred_check
        %p108 = pneg %p107
      $region14: #{tpu_custom_call.1} parent=5 // pred_check_branch
        %110 = sbr.rel (%p108) target = $region16
      $region15: #{tpu_custom_call.1} parent=5 // pred_region
        // Predicated region
        $region17: #{tpu_custom_call.1} parent=15 // pred_check
          %p111 = pneg %p56
        $region18: #{tpu_custom_call.1} parent=15 // pred_check_branch
          %113 = sbr.rel (%p111) target = $region20
        $region19: #{tpu_custom_call.1} parent=15 // pred_region
          %s114 = sand.u32 %s46, 1
          %s115 = scalar_lea.sflag [#allocation3], %s114
          %s116 = sand.u32 %s46, 1
          %s117 = smul.addr %s116, 64
          %s118 = scalar_lea.vmem [#allocation2], %s117
          %s119 = smul.u32 4, %s21
          %s120 = smul.u32 2, %s22
          %s122 = ssub.s32 1024, 1024
          %123 = vsyncadd %s115, %s122
          %s124 = smul.addr %s119, 2
          %s125 = sadd.s32 %s120, %s124
          %s126 = smul.addr %s20, 8
          %s127 = sadd.s32 %s125, %s126
          %s128 = smul.addr %s127, 128
          %s129 = scalar_lea.hbm %s0, %s128
          %s130 = sshll.u32 %s118, 4
          %s131 = int_to_ptr.vmem [resolvable:$true] %s130
          %136 = dma.hbm_to_vmem [thread:$0]  %s129, 1024, %s131, %s115, 128, 128, 8
        $region20: #{tpu_custom_call.1} parent=15 // pred_fallthru
          _
      $region16: #{tpu_custom_call.1} parent=5 // pred_fallthru
        _
      %p137 = scmp.le.s32.totalorder 1, %s13
      %p138 = scmp.lt.s32.totalorder %s13, 3
      %p139 = pnand %p137, %p138
      %p140 = pneg %p139
      // Predicated region
      $region21: #{tpu_custom_call.1} parent=5 // pred_check
        _
      $region22: #{tpu_custom_call.1} parent=5 // pred_check_branch
        %142 = sbr.rel (%p139) target = $region24
      $region23: #{tpu_custom_call.1} parent=5 // pred_region
        %s143 = ssub.s32 %s13, 1
        %s144 = sand.u32 %s49, 1
        %s145 = scalar_lea.sflag [#allocation3], %s144
        %s146 = sand.u32 %s49, 1
        %s147 = smul.addr %s146, 64
        %s148 = scalar_lea.vmem [#allocation2], %s147
        // Predicated region
        $region25: #{tpu_custom_call.1} parent=23 // pred_check
          %p149 = pneg %p62
        $region26: #{tpu_custom_call.1} parent=23 // pred_check_branch
          %151 = sbr.rel (%p149) target = $region28
        $region27: #{tpu_custom_call.1} parent=23 // pred_region
          %152 = dma.done %s145, 1024
        $region28: #{tpu_custom_call.1} parent=23 // pred_fallthru
          _
        %s153 = sand.u32 %s49, 1
        %s154 = scalar_lea.sflag [#allocation3], %s153
        %s155 = sand.u32 %s49, 1
        %s156 = smul.addr %s155, 64
        %s157 = scalar_lea.vmem [#allocation2], %s156
        %p158 = pneg %p62
        %p159 = pneg %p59
        %p160 = pneg %p92
        %p161 = pneg %p89
        %s162 = sand.u32 %s79, 1
        %s163 = scalar_lea.sflag [#allocation4], %s162
        %s164 = sand.u32 %s79, 1
        %s165 = smul.addr %s164, 64
        %s166 = scalar_lea.vmem [#allocation5], %s165
        %s167 = smul.u32 4, %s24
        %s168 = smul.u32 2, %s25
        %s169 = smul.u32 8, %s24
        %v170 = vld [vmem:[%s148] ss:$2 sm:$0xff]
        %vm171 = vcmask 130048
        %172 = vst.msk [vmem:[%s166] sm:$0xff] %vm171, %v170
        %s173 = scalar_lea.vmem %s148, 1 [#allocation2]
        %v174 = vld [vmem:[%s173] ss:$2 sm:$0xff]
        %s175 = scalar_lea.vmem %s166, 8 [#allocation5]
        %176 = vst.msk [vmem:[%s175] sm:$0xff] %vm171, %v174
        %s177 = scalar_lea.vmem %s148, 16 [#allocation2]
        %v178 = vld [vmem:[%s177] ss:$2 sm:$0xff]
        %s179 = scalar_lea.vmem %s166, 16 [#allocation5]
        %180 = vst.msk [vmem:[%s179] sm:$0xff] %vm171, %v178
        %s181 = scalar_lea.vmem %s177, 1 [#allocation2]
        %v182 = vld [vmem:[%s181] ss:$2 sm:$0xff]
        %s183 = scalar_lea.vmem %s166, 24 [#allocation5]
        %184 = vst.msk [vmem:[%s183] sm:$0xff] %vm171, %v182
        %s185 = scalar_lea.vmem %s148, 32 [#allocation2]
        %v186 = vld [vmem:[%s185] ss:$2 sm:$0xff]
        %s187 = scalar_lea.vmem %s166, 32 [#allocation5]
        %188 = vst.msk [vmem:[%s187] sm:$0xff] %vm171, %v186
        %s189 = scalar_lea.vmem %s185, 1 [#allocation2]
        %v190 = vld [vmem:[%s189] ss:$2 sm:$0xff]
        %s191 = scalar_lea.vmem %s166, 40 [#allocation5]
        %192 = vst.msk [vmem:[%s191] sm:$0xff] %vm171, %v190
        %s193 = scalar_lea.vmem %s148, 48 [#allocation2]
        %v194 = vld [vmem:[%s193] ss:$2 sm:$0xff]
        %s195 = scalar_lea.vmem %s166, 48 [#allocation5]
        %196 = vst.msk [vmem:[%s195] sm:$0xff] %vm171, %v194
        %s197 = scalar_lea.vmem %s193, 1 [#allocation2]
        %v198 = vld [vmem:[%s197] ss:$2 sm:$0xff]
        %s199 = scalar_lea.vmem %s166, 56 [#allocation5]
        %200 = vst.msk [vmem:[%s199] sm:$0xff] %vm171, %v198
        %s201 = sand.u32 %s79, 1
        %s202 = scalar_lea.sflag [#allocation4], %s201
        %s203 = sand.u32 %s79, 1
        %s204 = smul.addr %s203, 64
        %s205 = scalar_lea.vmem [#allocation5], %s204
        // Predicated region
        $region29: #{tpu_custom_call.1} parent=23 // pred_check
          %p206 = pneg %p89
        $region30: #{tpu_custom_call.1} parent=23 // pred_check_branch
          %208 = sbr.rel (%p206) target = $region32
        $region31: #{tpu_custom_call.1} parent=23 // pred_region
          %s209 = smul.u32 8, %s24
          %s211 = ssub.s32 1024, 1024
          %212 = vsyncadd %s202, %s211
          %s213 = sadd.s32 %s25, %s209
          %s214 = smul.addr %s23, 8
          %s215 = sadd.s32 %s213, %s214
          %s216 = smul.addr %s215, 128
          %s217 = scalar_lea.hbm %s1, %s216
          %s218 = sshll.u32 %s205, 4
          %s219 = int_to_ptr.vmem [resolvable:$true] %s218
          %224 = dma.vmem_to_hbm [thread:$0]  %s219, 1024, %s217, %s202, 128, 128, 8
        $region32: #{tpu_custom_call.1} parent=23 // pred_fallthru
          _
      $region24: #{tpu_custom_call.1} parent=5 // pred_fallthru
        _
      %p225 = scmp.le.s32.totalorder 2, %s13
      // Predicated region
      $region33: #{tpu_custom_call.1} parent=5 // pred_check
        %p226 = pneg %p225
      $region34: #{tpu_custom_call.1} parent=5 // pred_check_branch
        %228 = sbr.rel (%p226) target = $region36
      $region35: #{tpu_custom_call.1} parent=5 // pred_region
        %s229 = ssub.s32 %s13, 2
        // Predicated region
        $region37: #{tpu_custom_call.1} parent=35 // pred_check
          %p230 = pneg %p95
        $region38: #{tpu_custom_call.1} parent=35 // pred_check_branch
          %232 = sbr.rel (%p230) target = $region40
        $region39: #{tpu_custom_call.1} parent=35 // pred_region
          %s233 = sand.u32 %s80, 1
          %s234 = scalar_lea.sflag [#allocation4], %s233
          %s235 = sand.u32 %s80, 1
          %s236 = smul.addr %s235, 64
          %s237 = scalar_lea.vmem [#allocation5], %s236
          %238 = dma.done %s234, 1024
        $region40: #{tpu_custom_call.1} parent=35 // pred_fallthru
          _
      $region36: #{tpu_custom_call.1} parent=5 // pred_fallthru
        _
    $region6: #{tpu_custom_call.1} parent=1 // loop_footer
      %s17 = sadd.s32 1, %s13
    $region7: #{tpu_custom_call.1} parent=1 // loop_footer_branch
      %12 = sbr.rel target = $region3
    $region8: #{tpu_custom_call.1} parent=1 // loop_exit
      _
    %239 = vsyncpa [#allocation3], 1
    %s240 = scalar_lea.sflag [#allocation3], 1
    %241 = vsyncpa %s240, 1
    %242 = vsyncpa [#allocation4], 1
    %s243 = scalar_lea.sflag [#allocation4], 1
    %244 = vsyncpa %s243, 1

</llo_original>
